<compile_context>
chip_gen: v5e
topology: v5e:2x2
jax: 0.10.0
libtpu: 0.0.40
codegen_flags: <defaults>
</compile_context>

<pallas_src>
import jax
import jax.numpy as jnp
from jax.experimental import pallas as pl
from jax.experimental.pallas import tpu as pltpu

STATE_DIM = 3
ACTION_DIM = 1
IN_DIM = STATE_DIM + ACTION_DIM          # 4
AUG_DIM = IN_DIM + 1                     # 5 (ones row folds the layer-1 bias)
HIDDEN = 64


def _round_up(x, m):
    return ((x + m - 1) // m) * m


def critic_kernel(x_ref, w1_ref, w2_ref, b2_ref, w3_ref, b3_ref, o_ref):
    # Feature-major layout, batch on the lane axis:
    #   x_ref  : (5, BM)  bf16   rows = [s0, s1, s2, a0, 1]
    #   w1_ref : (64, 5)  bf16   = [W1 ; b1]^T  (bias folded via the ones row)
    #   w2_ref : (64, 64) bf16   = W2^T
    #   b2_ref : (64, 1)  f32
    #   w3_ref : (1, 64)  bf16   = W3^T
    #   b3_ref : (1, 1)   f32
    #   o_ref  : (1, BM)  f32    lane-dense output
    # Layer 1: h1 = relu(W1_aug @ x_aug)      -> (64, BM), MXU, f32 accumulate
    h1 = jnp.dot(w1_ref[...], x_ref[...], preferred_element_type=jnp.float32)
    h1 = jnp.maximum(h1, 0.0)

    # Layer 2: h2 = relu(W2^T @ h1 + b2)      -> (64, BM)
    h2 = jnp.dot(w2_ref[...], h1.astype(jnp.bfloat16),
                 preferred_element_type=jnp.float32)
    h2 = jnp.maximum(h2 + b2_ref[...], 0.0)

    # Layer 3: q = W3^T @ h2 + b3             -> (1, BM) (MXU has plenty of slack)
    q = jnp.dot(w3_ref[...], h2.astype(jnp.bfloat16),
                preferred_element_type=jnp.float32)
    o_ref[...] = q + b3_ref[...]


def _choose_block(B):
    if B <= 256:
        return _round_up(max(B, 1), 128)
    # Split large batches into at least 2 grid steps (v7x dual-TensorCore), cap 2048.
    return min(2048, _round_up(-(-B // 2), 128))


def critic_forward(s, a, params):
    """s: (B, state_dim), a: (B, action_dim) -> (B, 1) float32."""
    # TODO(synk): for tiny batches (single-env RL inference) a plain XLA path would
    # beat pallas_call fixed cost; kept on the kernel path here for demonstration.
    w1, b1, w2, b2, w3, b3 = params
    B = s.shape[0]

    BM = _choose_block(B)
    Bp = _round_up(max(B, 1), BM)

    # Fused concat + folded layer-1 bias, then transpose to feature-major (5, Bp).
    x_aug = jnp.concatenate([s, a, jnp.ones((B, 1), s.dtype)], axis=1)   # (B, 5)
    if Bp != B:
        x_aug = jnp.pad(x_aug, ((0, Bp - B), (0, 0)))
    x_t = x_aug.T.astype(jnp.bfloat16)                                   # (5, Bp)

    # Pre-transposed weights; bf16 only at the MXU operand boundary.
    w1_aug = jnp.concatenate([w1, b1], axis=0).T.astype(jnp.bfloat16)    # (64, 5)
    w2_t = w2.T.astype(jnp.bfloat16)                                     # (64, 64)
    w3_t = w3.T.astype(jnp.bfloat16)                                     # (1, 64)
    b2_c = b2.T.astype(jnp.float32)                                      # (64, 1)
    b3_c = b3.astype(jnp.float32).reshape(1, 1)                          # (1, 1)

    grid = (Bp // BM,)
    resident = lambda shape: pl.BlockSpec(shape, lambda i: (0, 0))       # VMEM-resident

    out = pl.pallas_call(
        critic_kernel,
        out_shape=jax.ShapeDtypeStruct((1, Bp), jnp.float32),
        grid=grid,
        in_specs=[
            pl.BlockSpec((AUG_DIM, BM), lambda i: (0, i)),   # x_aug, batch-tiled
            resident((HIDDEN, AUG_DIM)),                     # w1_aug
            resident((HIDDEN, HIDDEN)),                      # w2^T
            resident((HIDDEN, 1)),                           # b2
            resident((1, HIDDEN)),                           # w3^T
            resident((1, 1)),                                # b3
        ],
        out_specs=pl.BlockSpec((1, BM), lambda i: (0, i)),   # lane-dense output
        compiler_params=pltpu.CompilerParams(
            dimension_semantics=("parallel",)),              # megacore-shard on v7x
    )(x_t, w1_aug, w2_t, b2_c, w3_t, b3_c)

    return out[0, :B][:, None]


def init_params(key):
    """Deterministic init mimicking PyTorch nn.Linear default U[-1/sqrt(fan_in), +]."""
    ks = jax.random.split(key, 6)

    def linear(kw, kb, fan_in, fan_out):
        bound = 1.0 / jnp.sqrt(jnp.float32(fan_in))
        # stored as (in, out) so the math is y = x @ W + b
        w = jax.random.uniform(kw, (fan_in, fan_out), jnp.float32, -bound, bound)
        b = jax.random.uniform(kb, (1, fan_out), jnp.float32, -bound, bound)
        return w, b

    w1, b1 = linear(ks[0], ks[1], STATE_DIM + ACTION_DIM, HIDDEN)
    w2, b2 = linear(ks[2], ks[3], HIDDEN, HIDDEN)
    w3, b3 = linear(ks[4], ks[5], HIDDEN, 1)
    return (w1, b1, w2, b2, w3, b3)


def critic_ref(s, a, params):
    """Pure-JAX f32 reference of the PyTorch forward."""
    w1, b1, w2, b2, w3, b3 = params
    x = jnp.concatenate([s, a], axis=1)
    x = jnp.maximum(x @ w1 + b1, 0.0)
    x = jnp.maximum(x @ w2 + b2, 0.0)
    return x @ w3 + b3


if __name__ == "__main__":
    key = jax.random.PRNGKey(0)
    k_param, k_s, k_a = jax.random.split(key, 3)

    B = 8  # small demo batch
    params = init_params(k_param)
    s = jax.random.normal(k_s, (B, STATE_DIM), jnp.float32)
    a = jax.random.normal(k_a, (B, ACTION_DIM), jnp.float32)

    q = critic_forward(s, a, params)
    q = jax.block_until_ready(q)

    q_ref = critic_ref(s, a, params)
    assert q.shape == (B, 1)
    # bf16 matmul operands with f32 accumulation -> loosened tolerance.
    assert jnp.allclose(q, q_ref, atol=5e-2, rtol=5e-2)

    print("KERNEL_OK")
</pallas_src>

<mosaic_0001>
module attributes {stable_mosaic.version = 11 : i64} {
  func.func @critic_kernel(%arg0: i32, %arg1: memref<5x128xbf16, #tpu.memory_space<vmem>>, %arg2: memref<64x5xbf16, #tpu.memory_space<vmem>>, %arg3: memref<64x64xbf16, #tpu.memory_space<vmem>>, %arg4: memref<64x1xf32, #tpu.memory_space<vmem>>, %arg5: memref<1x64xbf16, #tpu.memory_space<vmem>>, %arg6: memref<1x1xf32, #tpu.memory_space<vmem>>, %arg7: memref<1x128xf32, #tpu.memory_space<vmem>>) attributes {dimension_semantics = [#tpu.dimension_semantics<parallel>], iteration_bounds = array<i64: 1>, scalar_prefetch = 0 : i64, scratch_operands = 0 : i64, tpu.core_type = #tpu.core_type<tc>, window_params = [{transform_indices = @transform_0, window_bounds = array<i64: 5, 128>}, {pipeline_mode = #tpu.pipeline_mode<synchronous>, transform_indices = @transform_1, window_bounds = array<i64: 64, 5>}, {pipeline_mode = #tpu.pipeline_mode<synchronous>, transform_indices = @transform_2, window_bounds = array<i64: 64, 64>}, {pipeline_mode = #tpu.pipeline_mode<synchronous>, transform_indices = @transform_3, window_bounds = array<i64: 64, 1>}, {pipeline_mode = #tpu.pipeline_mode<synchronous>, transform_indices = @transform_4, window_bounds = array<i64: 1, 64>}, {pipeline_mode = #tpu.pipeline_mode<synchronous>, transform_indices = @transform_5, window_bounds = array<i64: 1, 1>}, {transform_indices = @transform_6, window_bounds = array<i64: 1, 128>}]} {
    %c0 = arith.constant 0 : index
    %c0_0 = arith.constant 0 : index
    %0 = vector.load %arg2[%c0, %c0_0] : memref<64x5xbf16, #tpu.memory_space<vmem>>, vector<64x5xbf16>
    %c0_1 = arith.constant 0 : index
    %c0_2 = arith.constant 0 : index
    %1 = vector.load %arg1[%c0_1, %c0_2] : memref<5x128xbf16, #tpu.memory_space<vmem>>, vector<5x128xbf16>
    %cst = arith.constant dense<0.000000e+00> : vector<64x128xf32>
    %2 = tpu.matmul %0, %1, %cst {dimension_numbers = #tpu.dot_dimension_numbers<[1], [0], [0], [1], [0, 0, 1, 1], [], []>} : vector<64x5xbf16>, vector<5x128xbf16>, vector<64x128xf32> -> vector<64x128xf32>
    %cst_3 = arith.constant 0.000000e+00 : f32
    %3 = vector.broadcast %cst_3 : f32 to vector<64x128xf32>
    %4 = arith.maximumf %2, %3 : vector<64x128xf32>
    %c0_4 = arith.constant 0 : index
    %c0_5 = arith.constant 0 : index
    %5 = vector.load %arg3[%c0_4, %c0_5] : memref<64x64xbf16, #tpu.memory_space<vmem>>, vector<64x64xbf16>
    %6 = arith.truncf %4 : vector<64x128xf32> to vector<64x128xbf16>
    %cst_6 = arith.constant dense<0.000000e+00> : vector<64x128xf32>
    %7 = tpu.matmul %5, %6, %cst_6 {dimension_numbers = #tpu.dot_dimension_numbers<[1], [0], [0], [1], [0, 0, 1, 1], [], []>} : vector<64x64xbf16>, vector<64x128xbf16>, vector<64x128xf32> -> vector<64x128xf32>
    %c0_7 = arith.constant 0 : index
    %c0_8 = arith.constant 0 : index
    %8 = vector.load %arg4[%c0_7, %c0_8] : memref<64x1xf32, #tpu.memory_space<vmem>>, vector<64x1xf32>
    %9 = vector.broadcast %8 : vector<64x1xf32> to vector<64x128xf32>
    %10 = arith.addf %7, %9 : vector<64x128xf32>
    %cst_9 = arith.constant 0.000000e+00 : f32
    %11 = vector.broadcast %cst_9 : f32 to vector<64x128xf32>
    %12 = arith.maximumf %10, %11 : vector<64x128xf32>
    %c0_10 = arith.constant 0 : index
    %c0_11 = arith.constant 0 : index
    %13 = vector.load %arg5[%c0_10, %c0_11] : memref<1x64xbf16, #tpu.memory_space<vmem>>, vector<1x64xbf16>
    %14 = arith.truncf %12 : vector<64x128xf32> to vector<64x128xbf16>
    %cst_12 = arith.constant dense<0.000000e+00> : vector<1x128xf32>
    %15 = tpu.matmul %13, %14, %cst_12 {dimension_numbers = #tpu.dot_dimension_numbers<[1], [0], [0], [1], [0, 0, 1, 1], [], []>} : vector<1x64xbf16>, vector<64x128xbf16>, vector<1x128xf32> -> vector<1x128xf32>
    %c0_13 = arith.constant 0 : index
    %c0_14 = arith.constant 0 : index
    %16 = vector.load %arg6[%c0_13, %c0_14] : memref<1x1xf32, #tpu.memory_space<vmem>>, vector<1x1xf32>
    %17 = vector.broadcast %16 : vector<1x1xf32> to vector<1x128xf32>
    %18 = arith.addf %15, %17 : vector<1x128xf32>
    %c0_15 = arith.constant 0 : index
    %c0_16 = arith.constant 0 : index
    %19 = vector.load %arg7[%c0_15, %c0_16] : memref<1x128xf32, #tpu.memory_space<vmem>>, vector<1x128xf32>
    tpu.vector_store %arg7[%c0_15, %c0_16], %18 {strides = array<i32>} : memref<1x128xf32, #tpu.memory_space<vmem>>, vector<1x128xf32>,
    return
  }
  func.func @transform_0(%arg0: i32) -> (i32, i32) {
    %c0_i32 = arith.constant 0 : i32
    %c0_i32_0 = arith.constant 0 : i32
    return %c0_i32, %arg0 : i32, i32
  }
  func.func @transform_1(%arg0: i32) -> (i32, i32) {
    %c0_i32 = arith.constant 0 : i32
    %c0_i32_0 = arith.constant 0 : i32
    %c0_i32_1 = arith.constant 0 : i32
    return %c0_i32, %c0_i32_0 : i32, i32
  }
  func.func @transform_2(%arg0: i32) -> (i32, i32) {
    %c0_i32 = arith.constant 0 : i32
    %c0_i32_0 = arith.constant 0 : i32
    %c0_i32_1 = arith.constant 0 : i32
    return %c0_i32, %c0_i32_0 : i32, i32
  }
  func.func @transform_3(%arg0: i32) -> (i32, i32) {
    %c0_i32 = arith.constant 0 : i32
    %c0_i32_0 = arith.constant 0 : i32
    %c0_i32_1 = arith.constant 0 : i32
    return %c0_i32, %c0_i32_0 : i32, i32
  }
  func.func @transform_4(%arg0: i32) -> (i32, i32) {
    %c0_i32 = arith.constant 0 : i32
    %c0_i32_0 = arith.constant 0 : i32
    %c0_i32_1 = arith.constant 0 : i32
    return %c0_i32, %c0_i32_0 : i32, i32
  }
  func.func @transform_5(%arg0: i32) -> (i32, i32) {
    %c0_i32 = arith.constant 0 : i32
    %c0_i32_0 = arith.constant 0 : i32
    %c0_i32_1 = arith.constant 0 : i32
    return %c0_i32, %c0_i32_0 : i32, i32
  }
  func.func @transform_6(%arg0: i32) -> (i32, i32) {
    %c0_i32 = arith.constant 0 : i32
    %c0_i32_0 = arith.constant 0 : i32
    return %c0_i32, %arg0 : i32, i32
  }
}

</mosaic_0001>

<llo_original>
// kernel: tpu_custom_call.1
$region0: #{tpu_custom_call.1}
  #allocation0 [shape = 'u32[]', space=smem, size = 0x4, offset = 0x4, fixed_abs, tag = 'smem constant byte address 0x4 - core index']
  #allocation1 [shape = 'u32[72,128]{1,0:T(1,128)}', space=vmem, size = 0x9000, scoped, tag = 'internal scratch']
  #allocation2 [shape = 'f32[1,1]{1,0:T(1,128)S(1)}', space=vmem, size = 0x200, scoped, tag = 'scoped memory for tpu_custom_call.1']
  %s0 = inlined_call_operand.vmem [shape: bf16[5,128], index: 0, kind: input, shape index: {}]
  %s1 = inlined_call_operand.vmem [shape: bf16[64,5], index: 1, kind: input, shape index: {}]
  %s2 = inlined_call_operand.vmem [shape: bf16[64,64], index: 2, kind: input, shape index: {}]
  %s3 = inlined_call_operand.vmem [shape: f32[64,1], index: 3, kind: input, shape index: {}]
  %s4 = inlined_call_operand.vmem [shape: bf16[1,64], index: 4, kind: input, shape index: {}]
  %s5 = inlined_call_operand.<no memory space> [shape: f32[1,1], index: 5, kind: input, shape index: {}]
  %s6 = inlined_call_operand.hbm [shape: f32[1,128], index: 6, kind: output, shape index: {}]
  %s7 = sld [smem:[#allocation0]]
  $region34: #{tpu_custom_call.1} parent=0
    _
  %s9 = ssub.s32 1, %s7
  %s10 = scalar_select 0, %s9, %s7
  %v11 = vstv %s5
  %12 = vst [vmem:[#allocation2] sm:$0x1] %v11
  $region1: #{tpu_custom_call.1} parent=0
    #allocation3 [shape = 'u8[512]{0}', space=vmem, size = 0x400, scoped, tag = 'output window, operand 0, single buffered']
    #allocation4 [shape = 's32[1]{0}', space=sflag, size = 0x4, scoped, tag = 'scoped memory for tpu_custom_call.1']
    %13 = vsyncpa [#allocation4], 0
    // Predicated region
    $region2: #{tpu_custom_call.1} parent=1 // pred_check
      _
    $region3: #{tpu_custom_call.1} parent=1 // pred_check_branch
      %15 = sbr.rel (0) target = $region5
    $region4: #{tpu_custom_call.1} parent=1 // pred_region
      _
    $region5: #{tpu_custom_call.1} parent=1 // pred_fallthru
      _
    // Predicated region
    $region6: #{tpu_custom_call.1} parent=1 // pred_check
      _
    $region7: #{tpu_custom_call.1} parent=1 // pred_check_branch
      %17 = sbr.rel (0) target = $region9
    $region8: #{tpu_custom_call.1} parent=1 // pred_region
      _
    $region9: #{tpu_custom_call.1} parent=1 // pred_fallthru
      _
    // Predicated region
    $region10: #{tpu_custom_call.1} parent=1 // pred_check
      _
    $region11: #{tpu_custom_call.1} parent=1 // pred_check_branch
      %19 = sbr.rel (0) target = $region13
    $region12: #{tpu_custom_call.1} parent=1 // pred_region
      _
    $region13: #{tpu_custom_call.1} parent=1 // pred_fallthru
      _
    // Predicated region
    $region14: #{tpu_custom_call.1} parent=1 // pred_check
      _
    $region15: #{tpu_custom_call.1} parent=1 // pred_check_branch
      %21 = sbr.rel (0) target = $region17
    $region16: #{tpu_custom_call.1} parent=1 // pred_region
      _
    $region17: #{tpu_custom_call.1} parent=1 // pred_fallthru
      _
    // Predicated region
    $region18: #{tpu_custom_call.1} parent=1 // pred_check
      _
    $region19: #{tpu_custom_call.1} parent=1 // pred_check_branch
      %23 = sbr.rel (0) target = $region21
    $region20: #{tpu_custom_call.1} parent=1 // pred_region
      _
    $region21: #{tpu_custom_call.1} parent=1 // pred_fallthru
      _
    // Predicated region
    $region22: #{tpu_custom_call.1} parent=1 // pred_check
      _
    $region23: #{tpu_custom_call.1} parent=1 // pred_check_branch
      %25 = sbr.rel (0) target = $region25
    $region24: #{tpu_custom_call.1} parent=1 // pred_region
      _
    $region25: #{tpu_custom_call.1} parent=1 // pred_fallthru
      _
    %v27 = vld [vmem:[%s1] sm:$0xf]
    %v28 = vld [vmem:[%s1 + $0x4] sm:$0xf]
    %v29 = vld [vmem:[%s1 + $0x8] sm:$0xf]
    %v30 = vld [vmem:[%s1 + $0xc] sm:$0xf]
    %v31 = vld [vmem:[%s1 + $0x10] sm:$0xf]
    %v32 = vld [vmem:[%s1 + $0x14] sm:$0xf]
    %v33 = vld [vmem:[%s1 + $0x18] sm:$0xf]
    %v34 = vld [vmem:[%s1 + $0x1c] sm:$0xf]
    %v35 = vld [vmem:[%s0] sm:$0x7]
    %v44 = vunpack.c.l.b16 %v27
    %v45 = vunpack.c.l.b16 %v28
    %v46 = vunpack.c.l.b16 %v29
    %v47 = vunpack.c.l.b16 %v30
    %v48 = vunpack.c.l.b16 %v31
    %v49 = vunpack.c.l.b16 %v32
    %v50 = vunpack.c.l.b16 %v33
    %v51 = vunpack.c.l.b16 %v34
    %v52 = vpack.c.b16 %v45, %v44
    %v53 = vpack.c.b16 %v47, %v46
    %v54 = vpack.c.b16 %v49, %v48
    %v55 = vpack.c.b16 %v51, %v50
    %vm56 = vcmask 39936
    %v58 = vsel %vm56, %v52, 0
    %v61 = vsel %vm56, %v53, 0
    %v64 = vsel %vm56, %v54, 0
    %v67 = vsel %vm56, %v55, 0
    %vm69 = vcmask 1041408
    %vm70 = vcmask 1042432
    %v71 = vsel %vm69, 4294967295, 65535
    %v72 = vsel %vm70, %v71, 0
    %v74 = vand.u32 %v35, %v72
    %76 = vmatpush.bf16.msra.mxu0 0
    %77 = vmatpush.bf16.msra.mxu0 0
    %78 = vmatpush.bf16.msra.mxu0 0
    %79 = vmatpush.bf16.msra.mxu0 0
    %80 = vmatpush.bf16.msra.mxu0 0
    %81 = vmatpush.bf16.msra.mxu0 0
    %82 = vmatpush.bf16.msra.mxu0 0
    %83 = vmatpush.bf16.msra.mxu0 %v74
    %84 = vmatmul.bf16.gmra.mxu0 %v58
    %v85 = vpop.f32.mrf.mxu0
    %v86 = vadd.f32 0.0, %v85
    %v87 = vpop.f32.mrf.mxu0
    %v88 = vadd.f32 0.0, %v87
    %89 = vmatmul.bf16.gmra.mxu0 %v61
    %v90 = vpop.f32.mrf.mxu0
    %v91 = vadd.f32 0.0, %v90
    %v92 = vpop.f32.mrf.mxu0
    %v93 = vadd.f32 0.0, %v92
    %94 = vmatmul.bf16.gmra.mxu0 %v64
    %v95 = vpop.f32.mrf.mxu0
    %v96 = vadd.f32 0.0, %v95
    %v97 = vpop.f32.mrf.mxu0
    %v98 = vadd.f32 0.0, %v97
    %99 = vmatmul.bf16.gmra.mxu0 %v67
    %v100 = vpop.f32.mrf.mxu0
    %v101 = vadd.f32 0.0, %v100
    %v102 = vpop.f32.mrf.mxu0
    %v103 = vadd.f32 0.0, %v102
    %104 = vdwg.mxu0
    %v105 = vmax.f32 %v86, 0.0
    %v106 = vmax.f32 %v88, 0.0
    %v107 = vmax.f32 %v91, 0.0
    %v108 = vmax.f32 %v93, 0.0
    %v109 = vmax.f32 %v96, 0.0
    %v110 = vmax.f32 %v98, 0.0
    %v111 = vmax.f32 %v101, 0.0
    %v112 = vmax.f32 %v103, 0.0
    %v113 = vld [vmem:[%s2] sm:$0xf]
    %v114 = vld [vmem:[%s2 + $0x4] sm:$0xf]
    %v115 = vld [vmem:[%s2 + $0x8] sm:$0xf]
    %v116 = vld [vmem:[%s2 + $0xc] sm:$0xf]
    %v117 = vld [vmem:[%s2 + $0x10] sm:$0xf]
    %v118 = vld [vmem:[%s2 + $0x14] sm:$0xf]
    %v119 = vld [vmem:[%s2 + $0x18] sm:$0xf]
    %v120 = vld [vmem:[%s2 + $0x1c] sm:$0xf]
    %v121 = vpack.c.bf16 %v106, %v105
    %v122 = vpack.c.bf16 %v108, %v107
    %v123 = vpack.c.bf16 %v110, %v109
    %v124 = vpack.c.bf16 %v112, %v111
    %v125 = vld [vmem:[%s3] sm:$0xff]
    %v126 = vld [vmem:[%s3 + $0x8] sm:$0xff]
    %v127 = vld [vmem:[%s3 + $0x10] sm:$0xff]
    %v128 = vld [vmem:[%s3 + $0x18] sm:$0xff]
    %v129 = vld [vmem:[%s3 + $0x20] sm:$0xff]
    %v130 = vld [vmem:[%s3 + $0x28] sm:$0xff]
    %v131 = vld [vmem:[%s3 + $0x30] sm:$0xff]
    %v132 = vld [vmem:[%s3 + $0x38] sm:$0xff]
    %134 = vset.pattern.permute.xlu0 0
    %135 = vperm.xlu0 %134, %v125
    %v136 = vpop.permute.xlu0 %135
    %139 = vset.pattern.permute.xlu0 0
    %140 = vperm.xlu0 %139, %v126
    %v141 = vpop.permute.xlu0 %140
    %144 = vset.pattern.permute.xlu0 0
    %145 = vperm.xlu0 %144, %v127
    %v146 = vpop.permute.xlu0 %145
    %149 = vset.pattern.permute.xlu0 0
    %150 = vperm.xlu0 %149, %v128
    %v151 = vpop.permute.xlu0 %150
    %154 = vset.pattern.permute.xlu0 0
    %155 = vperm.xlu0 %154, %v129
    %v156 = vpop.permute.xlu0 %155
    %159 = vset.pattern.permute.xlu0 0
    %160 = vperm.xlu0 %159, %v130
    %v161 = vpop.permute.xlu0 %160
    %164 = vset.pattern.permute.xlu0 0
    %165 = vperm.xlu0 %164, %v131
    %v166 = vpop.permute.xlu0 %165
    %169 = vset.pattern.permute.xlu0 0
    %170 = vperm.xlu0 %169, %v132
    %v171 = vpop.permute.xlu0 %170
    %v181 = vunpack.c.l.b16 %v113
    %v182 = vunpack.c.l.b16 %v114
    %v183 = vunpack.c.l.b16 %v115
    %v184 = vunpack.c.l.b16 %v116
    %v185 = vunpack.c.l.b16 %v117
    %v186 = vunpack.c.l.b16 %v118
    %v187 = vunpack.c.l.b16 %v119
    %v188 = vunpack.c.l.b16 %v120
    %v189 = vpack.c.b16 %v182, %v181
    %v190 = vpack.c.b16 %v184, %v183
    %v191 = vpack.c.b16 %v186, %v185
    %v192 = vpack.c.b16 %v188, %v187
    %vm193 = vcmask 523264
    %v195 = vsel %vm193, %v189, 0
    %v198 = vsel %vm193, %v190, 0
    %v201 = vsel %vm193, %v191, 0
    %v204 = vsel %vm193, %v192, 0
    %206 = vmatpush.bf16.msra.mxu0 0
    %207 = vmatpush.bf16.msra.mxu0 0
    %208 = vmatpush.bf16.msra.mxu0 0
    %209 = vmatpush.bf16.msra.mxu0 0
    %210 = vmatpush.bf16.msra.mxu0 %v124
    %211 = vmatpush.bf16.msra.mxu0 %v123
    %212 = vmatpush.bf16.msra.mxu0 %v122
    %213 = vmatpush.bf16.msra.mxu0 %v121
    %214 = vmatmul.bf16.gmra.mxu0 %v195
    %v215 = vpop.f32.mrf.mxu0
    %v216 = vadd.f32 %v136, %v215
    %v217 = vpop.f32.mrf.mxu0
    %v218 = vadd.f32 %v141, %v217
    %219 = vmatmul.bf16.gmra.mxu0 %v198
    %v220 = vpop.f32.mrf.mxu0
    %v221 = vadd.f32 %v146, %v220
    %v222 = vpop.f32.mrf.mxu0
    %v223 = vadd.f32 %v151, %v222
    %224 = vmatmul.bf16.gmra.mxu0 %v201
    %v225 = vpop.f32.mrf.mxu0
    %v226 = vadd.f32 %v156, %v225
    %v227 = vpop.f32.mrf.mxu0
    %v228 = vadd.f32 %v161, %v227
    %229 = vmatmul.bf16.gmra.mxu0 %v204
    %v230 = vpop.f32.mrf.mxu0
    %v231 = vadd.f32 %v166, %v230
    %v232 = vpop.f32.mrf.mxu0
    %v233 = vadd.f32 %v171, %v232
    %234 = vdwg.mxu0
    %v235 = vmax.f32 %v216, 0.0
    %v236 = vmax.f32 %v218, 0.0
    %v237 = vmax.f32 %v221, 0.0
    %v238 = vmax.f32 %v223, 0.0
    %v239 = vmax.f32 %v226, 0.0
    %v240 = vmax.f32 %v228, 0.0
    %v241 = vmax.f32 %v231, 0.0
    %v242 = vmax.f32 %v233, 0.0
    %v243 = vld [vmem:[%s4] sm:$0x1]
    %v244 = vpack.c.bf16 %v236, %v235
    %v245 = vpack.c.bf16 %v238, %v237
    %v246 = vpack.c.bf16 %v240, %v239
    %v247 = vpack.c.bf16 %v242, %v241
    %v248 = vld [vmem:[#allocation2] sm:$0x1]
    %250 = vset.pattern.permute.xlu0 0
    %251 = vperm.xlu0 %250, %v248
    %v252 = vpop.permute.xlu0 %251
    %v254 = vperm.slane %v252, 0
    %v256 = vsel %vm193, %v243, 0
    %258 = vmatpush.bf16.msra.mxu0 0
    %259 = vmatpush.bf16.msra.mxu0 0
    %260 = vmatpush.bf16.msra.mxu0 0
    %261 = vmatpush.bf16.msra.mxu0 0
    %262 = vmatpush.bf16.msra.mxu0 %v247
    %263 = vmatpush.bf16.msra.mxu0 %v246
    %264 = vmatpush.bf16.msra.mxu0 %v245
    %265 = vmatpush.bf16.msra.mxu0 %v244
    %266 = vmatmul.bf16.gmra.mxu0 %v256
    %v267 = vpop.f32.mrf.mxu0
    %v268 = vadd.f32 %v254, %v267
    %v269 = vpop.f32.mrf.mxu0
    %270 = vdwg.mxu0
    %271 = vst [vmem:[#allocation3] sm:$0x1] %v268
    // Predicated region
    $region26: #{tpu_custom_call.1} parent=1 // pred_check
      _
    $region27: #{tpu_custom_call.1} parent=1 // pred_check_branch
      %273 = sbr.rel (0) target = $region29
    $region28: #{tpu_custom_call.1} parent=1 // pred_region
      %275 = vsyncadd [#allocation4], 0
      %s277 = sshll.u32 [#allocation3], 4
      %s278 = int_to_ptr.vmem [resolvable:$true] %s277
      %s279 = sshll.u32 %s6, 4
      %s280 = int_to_ptr.hbm [resolvable:$true] %s279
      %282 = dma.vmem_to_hbm [thread:$0]  %s278, 16, %s280, [#allocation4]
    $region29: #{tpu_custom_call.1} parent=1 // pred_fallthru
      _
    // Predicated region
    $region30: #{tpu_custom_call.1} parent=1 // pred_check
      _
    $region31: #{tpu_custom_call.1} parent=1 // pred_check_branch
      %284 = sbr.rel (0) target = $region33
    $region32: #{tpu_custom_call.1} parent=1 // pred_region
      %286 = dma.done [#allocation4], 16
    $region33: #{tpu_custom_call.1} parent=1 // pred_fallthru
      _
    %287 = vsyncpa [#allocation4], 1

</llo_original>
